<compile_context>
chip_gen: v7x
topology: tpu7x:2x2x1
jax: 0.10.0
libtpu: 0.0.40
codegen_flags: <defaults>
</compile_context>

<pallas_src>
import jax
import jax.numpy as jnp
from jax.experimental import pallas as pl
from jax.experimental.pallas import tpu as pltpu


# ---------------------------------------------------------------------------
# Zero-copy path: output aliases input, kernel is a no-op.
# ---------------------------------------------------------------------------
def _identity_alias_kernel(x_ref, o_ref):
    # The output HBM buffer aliases the input (input_output_aliases={0: 0}),
    # so there is nothing to move.  touch() records a read/write dependency
    # so the aliased output is treated as produced by this kernel.
    del x_ref
    pltpu.touch(o_ref)


def _aliased_identity(x2d):
    return pl.pallas_call(
        _identity_alias_kernel,
        out_shape=jax.ShapeDtypeStruct(x2d.shape, x2d.dtype),
        in_specs=[pl.BlockSpec(memory_space=pl.ANY)],   # raw HBM ref, no DMA
        out_specs=pl.BlockSpec(memory_space=pl.ANY),
        input_output_aliases={0: 0},                    # out buffer == in buffer
    )(x2d)


# ---------------------------------------------------------------------------
# Materializing fallback: tiled, lane-dense, pipelined VMEM copy.
# ---------------------------------------------------------------------------
def _copy_kernel(x_ref, o_ref):
    # Straight VMEM tile copy; BlockSpec double-buffering overlaps the
    # HBM->VMEM and VMEM->HBM DMAs of adjacent grid steps.
    o_ref[...] = x_ref[...]


def _pick_lanes(total):
    """Largest multiple of 128 that divides `total`, capped at 1024, so
    stores are unmasked full-lane vst (no vst.msk partial stores)."""
    if total % 128 != 0:
        return None
    lanes = 128
    while lanes * 2 <= 1024 and total % (lanes * 2) == 0:
        lanes *= 2
    return lanes


def _pick_row_tile(rows, lanes, itemsize, max_tile_bytes=4 * 1024 * 1024):
    """Largest row tile that divides `rows`, respects the dtype sublane
    multiple (8 f32 / 16 bf16 / 32 int8), and keeps one (tm, lanes) block
    under ~4 MiB so 2x double-buffered in+out blocks (~16 MiB) fit inside the
    scoped-VMEM budget on every chip generation."""
    sublane = max(1, 32 // itemsize)
    cap = max(1, max_tile_bytes // max(1, lanes * itemsize))
    for tm in range(min(rows, cap), 0, -1):
        if rows % tm == 0 and (tm % sublane == 0 or tm == rows):
            return tm
    return rows


def _materializing_copy(x2d):
    B, D = x2d.shape
    total = B * D
    itemsize = jnp.dtype(x2d.dtype).itemsize

    # Lane-dense view: make the kernel's last dim a large multiple of 128
    # whenever the element count allows (avoids masked partial stores and
    # maximizes per-DMA contiguity).
    lanes = _pick_lanes(total)
    if lanes is None:
        rows, lanes = B, D
    else:
        rows = total // lanes
    flat = jnp.reshape(x2d, (rows, lanes))
    tm = _pick_row_tile(rows, lanes, itemsize)

    out = pl.pallas_call(
        _copy_kernel,
        out_shape=jax.ShapeDtypeStruct((rows, lanes), flat.dtype),
        grid=(rows // tm,),
        in_specs=[pl.BlockSpec((tm, lanes), lambda i: (i, 0))],
        out_specs=pl.BlockSpec((tm, lanes), lambda i: (i, 0)),
        compiler_params=pltpu.CompilerParams(
            # Independent row tiles: shard across both TensorCores on v7x
            # (no-op on single-TC v5e/v6e).
            dimension_semantics=("parallel",),
            # Headroom for 2 double-buffered 4 MiB blocks even on v5e's
            # 16 MiB scoped default.
            vmem_limit_bytes=32 * 1024 * 1024,
        ),
    )(flat)
    return jnp.reshape(out, (B, D))


# ---------------------------------------------------------------------------
# Public forward.
# ---------------------------------------------------------------------------
def e_identity_forward(*inputs, materialize=False):
    """JAX/Pallas equivalent of e_identity.forward(*input).

    Returns the last positional input reshaped to (shape[0], shape[-1]).
    Default: zero-HBM-traffic aliased no-op kernel.
    materialize=True: fresh output buffer via a tiled lane-dense copy.
    """
    x = inputs[-1]
    B, D = x.shape[0], x.shape[-1]
    x2d = jnp.reshape(x, (B, D))  # same semantics as torch.reshape

    if materialize:
        return _materializing_copy(x2d)

    try:
        return _aliased_identity(x2d)
    except Exception:
        # Safety net: if the aliased no-op cannot lower on this jax/TPU
        # combination, fall back to the (still correct) tiled copy.
        return _materializing_copy(x2d)


if __name__ == "__main__":
    key = jax.random.PRNGKey(0)
    B, D = 2, 32
    # The SUBNET caller passes full state as the last positional arg: (B, 1, D).
    x = jax.random.normal(key, (B, 1, D), dtype=jnp.float32)
    ref = jnp.reshape(x, (B, D))

    # Default zero-copy (aliased) path.
    y = jax.block_until_ready(e_identity_forward(x))
    assert y.shape == (B, D), y.shape
    assert jnp.array_equal(y, ref), "aliased identity mismatch"

    # Materializing tiled-copy path (small, non-lane-dense shape).
    y2 = jax.block_until_ready(e_identity_forward(x, materialize=True))
    assert jnp.array_equal(y2, ref), "tiled copy mismatch"

    # Materializing path on a lane-dense-able shape (B*D % 128 == 0).
    x_big = jax.random.normal(jax.random.PRNGKey(0), (8, 1, 256), jnp.float32)
    y3 = jax.block_until_ready(e_identity_forward(x_big, materialize=True))
    assert jnp.array_equal(y3, jnp.reshape(x_big, (8, 256))), "lane-dense copy mismatch"

    # Multi-arg call (SUBNET passes several positional inputs; only the last matters).
    dummy = jnp.zeros((3, 7), jnp.float32)
    y4 = jax.block_until_ready(e_identity_forward(dummy, x))
    assert jnp.array_equal(y4, ref), "multi-arg identity mismatch"

    print("KERNEL_OK")
</pallas_src>

<mosaic_0001>
module attributes {stable_mosaic.version = 11 : i64} {
  func.func @_identity_alias_kernel(%arg0: memref<2x32xf32, #tpu.memory_space<any>>, %arg1: memref<2x32xf32, #tpu.memory_space<any>>) attributes {dimension_semantics = [], scalar_prefetch = 0 : i64, scratch_operands = 0 : i64, tpu.core_type = #tpu.core_type<tc>} {
    return
  }
}

module attributes {stable_mosaic.version = 11 : i64} {
  func.func @_copy_kernel(%arg0: i32, %arg1: memref<2x32xf32, #tpu.memory_space<vmem>>, %arg2: memref<2x32xf32, #tpu.memory_space<vmem>>) attributes {dimension_semantics = [#tpu.dimension_semantics<parallel>], iteration_bounds = array<i64: 1>, scalar_prefetch = 0 : i64, scratch_operands = 0 : i64, tpu.core_type = #tpu.core_type<tc>, window_params = [{transform_indices = @transform_0, window_bounds = array<i64: 2, 32>}, {transform_indices = @transform_1, window_bounds = array<i64: 2, 32>}]} {
    %c0 = arith.constant 0 : index
    %c0_0 = arith.constant 0 : index
    %0 = vector.load %arg1[%c0, %c0_0] : memref<2x32xf32, #tpu.memory_space<vmem>>, vector<2x32xf32>
    %c0_1 = arith.constant 0 : index
    %c0_2 = arith.constant 0 : index
    %1 = vector.load %arg2[%c0_1, %c0_2] : memref<2x32xf32, #tpu.memory_space<vmem>>, vector<2x32xf32>
    tpu.vector_store %arg2[%c0_1, %c0_2], %0 {strides = array<i32>} : memref<2x32xf32, #tpu.memory_space<vmem>>, vector<2x32xf32>,
    return
  }
  func.func @transform_0(%arg0: i32) -> (i32, i32) {
    %c0_i32 = arith.constant 0 : i32
    %c0_i32_0 = arith.constant 0 : i32
    return %arg0, %c0_i32 : i32, i32
  }
  func.func @transform_1(%arg0: i32) -> (i32, i32) {
    %c0_i32 = arith.constant 0 : i32
    %c0_i32_0 = arith.constant 0 : i32
    return %arg0, %c0_i32 : i32, i32
  }
}

</mosaic_0001>

<llo_original>
// kernel: tpu_custom_call.1
$region0: #{tpu_custom_call.1}
  #allocation0 [shape = 'u32[]', space=smem, size = 0x4, offset = 0x4, fixed_abs, tag = 'smem constant byte address 0x4 - core index']
  #allocation1 [shape = 'u32[144,128]{1,0:T(1,128)}', space=vmem, size = 0x12000, scoped, tag = 'internal scratch']
  %s0 = inlined_call_operand.hbm [shape: f32[2,32], index: 0, kind: input, shape index: {}, may-alias: {0,1}]
  %s1 = inlined_call_operand.hbm [shape: f32[2,32], index: 1, kind: output, shape index: {}, may-alias: {0,1}]
  %s2 = sld [smem:[#allocation0]]
  $region2: #{tpu_custom_call.1} parent=0
    _
  %s4 = ssub.s32 1, %s2
  %s5 = scalar_select 0, %s4, %s2

// kernel: tpu_custom_call.1
$region0: #{tpu_custom_call.1}
  #allocation0 [shape = 'u32[]', space=smem, size = 0x4, offset = 0x4, fixed_abs, tag = 'smem constant byte address 0x4 - core index']
  #allocation1 [shape = 'u32[144,128]{1,0:T(1,128)}', space=vmem, size = 0x12000, scoped, tag = 'internal scratch']
  %s0 = inlined_call_operand.hbm [shape: f32[2,32], index: 0, kind: input, shape index: {}]
  %s1 = inlined_call_operand.hbm [shape: f32[2,32], index: 1, kind: output, shape index: {}]
  %s2 = sld [smem:[#allocation0]]
  $region18: #{tpu_custom_call.1} parent=0
    _
  %s4 = ssub.s32 1, %s2
  %s5 = scalar_select 0, %s4, %s2
  $region1: #{tpu_custom_call.1} parent=0
    #allocation2 [shape = 'u8[1024]{0}', space=vmem, size = 0x400, scoped, tag = 'input window, operand 0, single buffered']
    #allocation3 [shape = 's32[1]{0}', space=sflag, size = 0x4, scoped, tag = 'scoped memory for tpu_custom_call.1']
    #allocation4 [shape = 's32[1]{0}', space=sflag, size = 0x4, scoped, tag = 'scoped memory for tpu_custom_call.1']
    #allocation5 [shape = 'u8[1024]{0}', space=vmem, size = 0x400, scoped, tag = 'output window, operand 0, single buffered']
    %6 = vsyncpa [#allocation3], 0
    %7 = vsyncpa [#allocation4], 0
    // Predicated region
    $region2: #{tpu_custom_call.1} parent=1 // pred_check
      _
    $region3: #{tpu_custom_call.1} parent=1 // pred_check_branch
      %9 = sbr.rel (0) target = $region5
    $region4: #{tpu_custom_call.1} parent=1 // pred_region
      %s11 = ssub.s32 32, 32
      %12 = vsyncadd [#allocation3], %s11
      %s14 = sshll.u32 [#allocation2], 4
      %s15 = int_to_ptr.vmem [resolvable:$true] %s14
      %17 = dma.hbm_to_vmem [thread:$0]  %s0, 32, %s15, [#allocation3]
    $region5: #{tpu_custom_call.1} parent=1 // pred_fallthru
      _
    // Predicated region
    $region6: #{tpu_custom_call.1} parent=1 // pred_check
      _
    $region7: #{tpu_custom_call.1} parent=1 // pred_check_branch
      %19 = sbr.rel (0) target = $region9
    $region8: #{tpu_custom_call.1} parent=1 // pred_region
      %20 = dma.done [#allocation3], 32
    $region9: #{tpu_custom_call.1} parent=1 // pred_fallthru
      _
    %v21 = vld [vmem:[#allocation2] sm:$0x3]
    %vm22 = vcmask 254976
    %23 = vst.msk [vmem:[#allocation5] sm:$0x3] %vm22, %v21
    // Predicated region
    $region10: #{tpu_custom_call.1} parent=1 // pred_check
      _
    $region11: #{tpu_custom_call.1} parent=1 // pred_check_branch
      %25 = sbr.rel (0) target = $region13
    $region12: #{tpu_custom_call.1} parent=1 // pred_region
      %s27 = ssub.s32 32, 32
      %28 = vsyncadd [#allocation4], %s27
      %s30 = sshll.u32 [#allocation5], 4
      %s31 = int_to_ptr.vmem [resolvable:$true] %s30
      %33 = dma.vmem_to_hbm [thread:$0]  %s31, 32, %s1, [#allocation4]
    $region13: #{tpu_custom_call.1} parent=1 // pred_fallthru
      _
    // Predicated region
    $region14: #{tpu_custom_call.1} parent=1 // pred_check
      _
    $region15: #{tpu_custom_call.1} parent=1 // pred_check_branch
      %35 = sbr.rel (0) target = $region17
    $region16: #{tpu_custom_call.1} parent=1 // pred_region
      %36 = dma.done [#allocation4], 32
    $region17: #{tpu_custom_call.1} parent=1 // pred_fallthru
      _
    %37 = vsyncpa [#allocation3], 1
    %38 = vsyncpa [#allocation4], 1

</llo_original>
